<compile_context>
chip_gen: v7x
topology: tpu7x:2x2x1
jax: 0.10.0
libtpu: 0.0.40
codegen_flags: <defaults>
</compile_context>

<pallas_src>
import jax
import jax.numpy as jnp
from jax import lax
from jax.experimental import pallas as pl
from jax.experimental.pallas import tpu as pltpu


def _gelu_kernel(x_ref, o_ref):
    x = x_ref[...]
    # Exact GELU: 0.5 * x * (1 + erf(x / sqrt(2))) -- matches nn.GELU() default.
    # Compute in f32 (erf accuracy), keep I/O in the caller's dtype so HBM
    # traffic stays at the input width (e.g. bf16 callers move half the bytes).
    xf = x.astype(jnp.float32)
    inv_sqrt2 = jnp.float32(0.7071067811865476)
    y = 0.5 * xf * (1.0 + lax.erf(xf * inv_sqrt2))
    o_ref[...] = y.astype(o_ref.dtype)


def _round_up(a: int, b: int) -> int:
    return ((a + b - 1) // b) * b


def gelu_pallas(x: jax.Array, *, lane_width: int = 1024,
                max_block_rows: int = 512) -> jax.Array:
    """Elementwise exact GELU. Accepts any shape; layout is pure plumbing."""
    orig_shape = x.shape
    dtype = x.dtype
    total = x.size

    # Flatten to a lane-dense 2-D view: last dim = lane_width (multiple of 128).
    flat = x.reshape(-1)
    rows_needed = pl.cdiv(total, lane_width)
    # Row tile: multiple of 8 (sublane constraint), no larger than needed.
    block_rows = min(max_block_rows, _round_up(rows_needed, 8))
    padded_rows = _round_up(rows_needed, block_rows)
    padded_total = padded_rows * lane_width
    if padded_total != total:
        flat = jnp.pad(flat, (0, padded_total - total))
    x2 = flat.reshape(padded_rows, lane_width)

    grid = (padded_rows // block_rows,)
    out2 = pl.pallas_call(
        _gelu_kernel,
        out_shape=jax.ShapeDtypeStruct((padded_rows, lane_width), dtype),
        grid=grid,
        in_specs=[pl.BlockSpec((block_rows, lane_width), lambda i: (i, 0))],
        out_specs=pl.BlockSpec((block_rows, lane_width), lambda i: (i, 0)),
        compiler_params=pltpu.CompilerParams(
            dimension_semantics=("parallel",),
        ),
    )(x2)

    return out2.reshape(-1)[:total].reshape(orig_shape)


def gelu_reference(x: jax.Array) -> jax.Array:
    xf = x.astype(jnp.float32)
    return (0.5 * xf * (1.0 + lax.erf(xf * jnp.float32(0.7071067811865476)))
            ).astype(x.dtype)


if __name__ == "__main__":
    key = jax.random.PRNGKey(0)

    # Small PointTensor-like feature matrix: 256 points, 32 channels.
    x = jax.random.normal(key, (256, 32), dtype=jnp.float32)
    out = gelu_pallas(x)
    jax.block_until_ready(out)
    ref = gelu_reference(x)
    assert out.shape == x.shape and out.dtype == x.dtype
    assert jnp.allclose(out, ref, atol=1e-5, rtol=1e-5)

    # Ragged point count (exercises the padded-tail path).
    x2 = jax.random.normal(jax.random.PRNGKey(1), (250, 37), dtype=jnp.float32)
    out2 = gelu_pallas(x2)
    jax.block_until_ready(out2)
    assert jnp.allclose(out2, gelu_reference(x2), atol=1e-5, rtol=1e-5)

    print("KERNEL_OK")
</pallas_src>

<mosaic_0001>
module attributes {stable_mosaic.version = 11 : i64} {
  func.func @_gelu_kernel(%arg0: i32, %arg1: memref<8x1024xf32, #tpu.memory_space<vmem>>, %arg2: memref<8x1024xf32, #tpu.memory_space<vmem>>) attributes {dimension_semantics = [#tpu.dimension_semantics<parallel>], iteration_bounds = array<i64: 1>, scalar_prefetch = 0 : i64, scratch_operands = 0 : i64, tpu.core_type = #tpu.core_type<tc>, window_params = [{transform_indices = @transform_0, window_bounds = array<i64: 8, 1024>}, {transform_indices = @transform_1, window_bounds = array<i64: 8, 1024>}]} {
    %c0 = arith.constant 0 : index
    %c0_0 = arith.constant 0 : index
    %0 = vector.load %arg1[%c0, %c0_0] : memref<8x1024xf32, #tpu.memory_space<vmem>>, vector<8x1024xf32>
    %cst = arith.constant 5.000000e-01 : f32
    %1 = vector.broadcast %cst : f32 to vector<8x1024xf32>
    %2 = arith.mulf %1, %0 : vector<8x1024xf32>
    %cst_1 = arith.constant 0.707106769 : f32
    %3 = vector.broadcast %cst_1 : f32 to vector<8x1024xf32>
    %4 = arith.mulf %0, %3 : vector<8x1024xf32>
    %5 = math.erf %4 : vector<8x1024xf32>
    %cst_2 = arith.constant 1.000000e+00 : f32
    %6 = vector.broadcast %cst_2 : f32 to vector<8x1024xf32>
    %7 = arith.addf %6, %5 : vector<8x1024xf32>
    %8 = arith.mulf %2, %7 : vector<8x1024xf32>
    %c0_3 = arith.constant 0 : index
    %c0_4 = arith.constant 0 : index
    %9 = vector.load %arg2[%c0_3, %c0_4] : memref<8x1024xf32, #tpu.memory_space<vmem>>, vector<8x1024xf32>
    tpu.vector_store %arg2[%c0_3, %c0_4], %8 {strides = array<i32>} : memref<8x1024xf32, #tpu.memory_space<vmem>>, vector<8x1024xf32>,
    return
  }
  func.func @transform_0(%arg0: i32) -> (i32, i32) {
    %c0_i32 = arith.constant 0 : i32
    %c0_i32_0 = arith.constant 0 : i32
    return %arg0, %c0_i32 : i32, i32
  }
  func.func @transform_1(%arg0: i32) -> (i32, i32) {
    %c0_i32 = arith.constant 0 : i32
    %c0_i32_0 = arith.constant 0 : i32
    return %arg0, %c0_i32 : i32, i32
  }
}

</mosaic_0001>

<llo_original>
// kernel: tpu_custom_call.1
$region0: #{tpu_custom_call.1}
  #allocation0 [shape = 'u32[]', space=smem, size = 0x4, offset = 0x4, fixed_abs, tag = 'smem constant byte address 0x4 - core index']
  #allocation1 [shape = 'u32[144,128]{1,0:T(1,128)}', space=vmem, size = 0x12000, scoped, tag = 'internal scratch']
  %s0 = inlined_call_operand.hbm [shape: f32[8,1024], index: 0, kind: input, shape index: {}]
  %s1 = inlined_call_operand.hbm [shape: f32[8,1024], index: 1, kind: output, shape index: {}]
  %s2 = sld [smem:[#allocation0]]
  $region18: #{tpu_custom_call.1} parent=0
    _
  %s4 = ssub.s32 1, %s2
  %s5 = scalar_select 0, %s4, %s2
  $region1: #{tpu_custom_call.1} parent=0
    #allocation2 [shape = 'u8[32768]{0}', space=vmem, size = 0x8000, scoped, tag = 'input window, operand 0, single buffered']
    #allocation3 [shape = 's32[1]{0}', space=sflag, size = 0x4, scoped, tag = 'scoped memory for tpu_custom_call.1']
    #allocation4 [shape = 's32[1]{0}', space=sflag, size = 0x4, scoped, tag = 'scoped memory for tpu_custom_call.1']
    #allocation5 [shape = 'u8[32768]{0}', space=vmem, size = 0x8000, scoped, tag = 'output window, operand 0, single buffered']
    %6 = vsyncpa [#allocation3], 0
    %7 = vsyncpa [#allocation4], 0
    // Predicated region
    $region2: #{tpu_custom_call.1} parent=1 // pred_check
      _
    $region3: #{tpu_custom_call.1} parent=1 // pred_check_branch
      %9 = sbr.rel (0) target = $region5
    $region4: #{tpu_custom_call.1} parent=1 // pred_region
      %s11 = ssub.s32 1024, 1024
      %12 = vsyncadd [#allocation3], %s11
      %s14 = sshll.u32 [#allocation2], 4
      %s15 = int_to_ptr.vmem [resolvable:$true] %s14
      %17 = dma.hbm_to_vmem [thread:$0]  %s0, 1024, %s15, [#allocation3]
    $region5: #{tpu_custom_call.1} parent=1 // pred_fallthru
      _
    // Predicated region
    $region6: #{tpu_custom_call.1} parent=1 // pred_check
      _
    $region7: #{tpu_custom_call.1} parent=1 // pred_check_branch
      %19 = sbr.rel (0) target = $region9
    $region8: #{tpu_custom_call.1} parent=1 // pred_region
      %20 = dma.done [#allocation3], 1024
    $region9: #{tpu_custom_call.1} parent=1 // pred_fallthru
      _
    %v21 = vld [vmem:[#allocation2] sm:$0xff]
    %v22 = vld [vmem:[#allocation2 + $0x8] sm:$0xff]
    %v23 = vld [vmem:[#allocation2 + $0x10] sm:$0xff]
    %v24 = vld [vmem:[#allocation2 + $0x18] sm:$0xff]
    %v25 = vld [vmem:[#allocation2 + $0x20] sm:$0xff]
    %v26 = vld [vmem:[#allocation2 + $0x28] sm:$0xff]
    %v27 = vld [vmem:[#allocation2 + $0x30] sm:$0xff]
    %v28 = vld [vmem:[#allocation2 + $0x38] sm:$0xff]
    %v29 = vmul.f32 %v21, 0.5
    %v30 = vmul.f32 %v22, 0.5
    %v31 = vmul.f32 %v23, 0.5
    %v32 = vmul.f32 %v24, 0.5
    %v33 = vmul.f32 %v25, 0.5
    %v34 = vmul.f32 %v26, 0.5
    %v35 = vmul.f32 %v27, 0.5
    %v36 = vmul.f32 %v28, 0.5
    %v37 = vmul.f32 %v21, 0.70710677
    %v38 = vmul.f32 %v22, 0.70710677
    %v39 = vmul.f32 %v23, 0.70710677
    %v40 = vmul.f32 %v24, 0.70710677
    %v41 = vmul.f32 %v25, 0.70710677
    %v42 = vmul.f32 %v26, 0.70710677
    %v43 = vmul.f32 %v27, 0.70710677
    %v44 = vmul.f32 %v28, 0.70710677
    %v45 = verf.f32.pop %v37
    %v46 = verf.f32.pop %v38
    %v47 = verf.f32.pop %v39
    %v48 = verf.f32.pop %v40
    %v49 = verf.f32.pop %v41
    %v50 = verf.f32.pop %v42
    %v51 = verf.f32.pop %v43
    %v52 = verf.f32.pop %v44
    %v53 = vadd.f32 %v45, 1.0
    %v54 = vadd.f32 %v46, 1.0
    %v55 = vadd.f32 %v47, 1.0
    %v56 = vadd.f32 %v48, 1.0
    %v57 = vadd.f32 %v49, 1.0
    %v58 = vadd.f32 %v50, 1.0
    %v59 = vadd.f32 %v51, 1.0
    %v60 = vadd.f32 %v52, 1.0
    %v61 = vmul.f32 %v29, %v53
    %v62 = vmul.f32 %v30, %v54
    %v63 = vmul.f32 %v31, %v55
    %v64 = vmul.f32 %v32, %v56
    %v65 = vmul.f32 %v33, %v57
    %v66 = vmul.f32 %v34, %v58
    %v67 = vmul.f32 %v35, %v59
    %v68 = vmul.f32 %v36, %v60
    %69 = vst [vmem:[#allocation5] sm:$0xff] %v61
    %70 = vst [vmem:[#allocation5 + $0x8] sm:$0xff] %v62
    %71 = vst [vmem:[#allocation5 + $0x10] sm:$0xff] %v63
    %72 = vst [vmem:[#allocation5 + $0x18] sm:$0xff] %v64
    %73 = vst [vmem:[#allocation5 + $0x20] sm:$0xff] %v65
    %74 = vst [vmem:[#allocation5 + $0x28] sm:$0xff] %v66
    %75 = vst [vmem:[#allocation5 + $0x30] sm:$0xff] %v67
    %76 = vst [vmem:[#allocation5 + $0x38] sm:$0xff] %v68
    // Predicated region
    $region10: #{tpu_custom_call.1} parent=1 // pred_check
      _
    $region11: #{tpu_custom_call.1} parent=1 // pred_check_branch
      %78 = sbr.rel (0) target = $region13
    $region12: #{tpu_custom_call.1} parent=1 // pred_region
      %s80 = ssub.s32 1024, 1024
      %81 = vsyncadd [#allocation4], %s80
      %s83 = sshll.u32 [#allocation5], 4
      %s84 = int_to_ptr.vmem [resolvable:$true] %s83
      %86 = dma.vmem_to_hbm [thread:$0]  %s84, 1024, %s1, [#allocation4]
    $region13: #{tpu_custom_call.1} parent=1 // pred_fallthru
      _
    // Predicated region
    $region14: #{tpu_custom_call.1} parent=1 // pred_check
      _
    $region15: #{tpu_custom_call.1} parent=1 // pred_check_branch
      %88 = sbr.rel (0) target = $region17
    $region16: #{tpu_custom_call.1} parent=1 // pred_region
      %89 = dma.done [#allocation4], 1024
    $region17: #{tpu_custom_call.1} parent=1 // pred_fallthru
      _
    %90 = vsyncpa [#allocation3], 1
    %91 = vsyncpa [#allocation4], 1

</llo_original>
